<compile_context>
chip_gen: v6e
topology: v6e:2x2x1
jax: 0.10.0
libtpu: 0.0.40
codegen_flags: <defaults>
</compile_context>

<pallas_src>
import math

import jax
import jax.numpy as jnp
from jax.experimental import pallas as pl
from jax.experimental.pallas import tpu as pltpu


def _demix_kernel(x_ref, w_ref, b_ref, o_ref):
    """o = x @ w + b, contraction on the MXU with f32 accumulation.

    Lane-dense path: x (TB, C*S), w (C*S, C) block-diag, b (1, C),  o (TB, C)
    Tall path:       x (TR, S),   w (S, 1),              b (TR, 1), o (TR, 1)
    """
    x = x_ref[...]
    w = w_ref[...]
    if w.dtype != x.dtype:
        # bf16/int8 activations feed the MXU natively; only the tiny weight tile
        # is cast, never the whole activation block.
        w = w.astype(x.dtype)
    acc = jnp.dot(x, w, preferred_element_type=jnp.float32,
                  precision=jax.lax.Precision.HIGHEST)
    # nonlin = Identity (module default); f32 bias broadcasts over the block rows.
    o_ref[...] = (acc + b_ref[...]).astype(o_ref.dtype)
    # TODO(synk): unitnorm (F.normalize over dim=1) and non-Identity nonlinearities
    # are not implemented; the module defaults (Identity, unitnorm=False) are.


def _tpu_budgets():
    """(per-input-buffer byte target, vmem_limit_bytes) per TPU generation."""
    try:
        kind = jax.devices()[0].device_kind.lower()
    except Exception:
        kind = ""
    if "v7" in kind:
        # v7x: 64 MiB physical VMEM, 3.2 TB/s HBM -> ~14 MiB double-buffered tiles.
        return 14 * 1024 * 1024, 48 * 1024 * 1024
    # v5e / v6e: 128 MiB physical VMEM -> bigger tiles amortize per-step overhead.
    return 20 * 1024 * 1024, 64 * 1024 * 1024


def _pick_block_rows(total, bytes_per_row, sub, per_buf_target):
    """Rows per block: <= per_buf_target bytes, multiple of `sub`, and split into
    >= 2 (ideally 4) blocks so both v7x TensorCores get work and DMA pipelines."""
    if total <= sub:
        return total                                    # single full block
    blk = min(total, max(sub, per_buf_target // max(1, bytes_per_row)))
    min_blocks = 4 if total >= 4 * sub else (2 if total >= 2 * sub else 1)
    if min_blocks > 1:
        blk = min(blk, max(sub, pl.cdiv(total, min_blocks)))
    return max(sub, (blk // sub) * sub)


def demixing_forward(x, w, b_in, *, force_tall=False, block_rows=None):
    """DeMixing forward.  x: (B, C, S); w: (size,) with size == S; b_in: (size,).
    Returns (B, C), matching torch.tensordot(x, w, dims=([-1],[0])) + b_in."""
    B, C, S = x.shape
    size = w.shape[0]
    assert S == size, "contracted (last) axis of x must equal size"
    assert b_in.shape == (size,)
    assert C == size, "torch broadcasting of `+ b_in` requires demix last dim == size"

    # Keep parameters in f32 (torch keeps f32 master params); x alone picks the MXU dtype.
    w = w.astype(jnp.float32)
    b_in = b_in.astype(jnp.float32)

    itemsize = jnp.dtype(x.dtype).itemsize
    sub = max(8, 32 // itemsize)               # sublane pack: 8 (f32) / 16 (bf16) / 32 (int8)
    per_buf_target, vmem_limit = _tpu_budgets()

    # Lane-dense path whenever the block-diagonal weight stays small (covers the
    # typical meegnet configuration of a few tens of components).
    w_bd_bytes = (C * S) * C * 4
    use_dense = (not force_tall) and (w_bd_bytes <= 4 * 1024 * 1024)

    if use_dense:
        x2 = x.reshape(B, C * S)                                  # free row-major collapse
        w2 = jnp.kron(jnp.eye(C, dtype=jnp.float32), w.reshape(S, 1))   # (C*S, C) block-diag
        b2 = b_in.reshape(1, C)
        rows, row_bytes, out_cols = B, C * S * itemsize, C
        out_reshape = None
    else:
        x2 = x.reshape(B * C, S)                                  # free row-major collapse
        w2 = w.reshape(S, 1)
        b2 = jnp.tile(b_in.reshape(1, C), (B, 1)).reshape(B * C, 1)   # bias per flattened row
        rows, row_bytes, out_cols = B * C, S * itemsize, 1
        out_reshape = (B, C)

    if block_rows is None:
        block_rows = _pick_block_rows(rows, row_bytes, sub, per_buf_target)
    assert block_rows == rows or block_rows % sub == 0, "block_rows must be a sublane multiple"
    # TODO(synk): for extreme S (rows too large even at the minimum tile) add an
    # S-reduction grid axis with a pl.when-initialized accumulator instead of failing.
    assert (2 * block_rows * row_bytes + (2 * w_bd_bytes if use_dense else 0)) <= vmem_limit, (
        "row too large for double-buffered VMEM tiles")

    grid = (pl.cdiv(rows, block_rows),)

    in_specs = [
        pl.BlockSpec((block_rows, x2.shape[1]), lambda i: (i, 0)),
        pl.BlockSpec(w2.shape, lambda i: (0, 0)),
        (pl.BlockSpec((1, C), lambda i: (0, 0)) if use_dense
         else pl.BlockSpec((block_rows, 1), lambda i: (i, 0))),
    ]
    out_specs = pl.BlockSpec((block_rows, out_cols), lambda i: (i, 0))

    cost = pl.CostEstimate(
        flops=2 * B * C * S,
        transcendentals=0,
        bytes_accessed=(x2.size * itemsize + rows * out_cols * itemsize
                        + int(w2.size) * 4 + int(b2.size) * 4),
    )

    out = pl.pallas_call(
        _demix_kernel,
        out_shape=jax.ShapeDtypeStruct((rows, out_cols), x.dtype),
        grid=grid,
        in_specs=in_specs,
        out_specs=out_specs,
        compiler_params=pltpu.CompilerParams(
            dimension_semantics=("parallel",),       # megacore sharding on v7x
            vmem_limit_bytes=vmem_limit,
        ),
        cost_estimate=cost,
    )(x2, w2, b2)

    if out_reshape is not None:
        out = out.reshape(out_reshape)               # (B*C, 1) -> (B, C), free
    return out


if __name__ == "__main__":
    key = jax.random.PRNGKey(0)
    kx, kw = jax.random.split(key)

    size = 16            # number of demixing components == contracted-axis length
    B, C, S = 16, size, size
    x = jax.random.normal(kx, (B, C, S), dtype=jnp.float32)

    # Deterministic kaiming_uniform-style init for w (shape (size,)), relu gain.
    fan_in = size
    bound = math.sqrt(2.0) * math.sqrt(3.0 / fan_in)
    w = jax.random.uniform(kw, (size,), minval=-bound, maxval=bound, dtype=jnp.float32)
    b_in = jnp.full((size,), 0.0, dtype=jnp.float32)   # nn.init.constant_(b_in, bias_const=0)

    # Pure-JAX reference (mirrors torch.tensordot + bias broadcast), f32-exact.
    ref = jnp.tensordot(x, w, axes=([-1], [0]),
                        precision=jax.lax.Precision.HIGHEST) + b_in

    # Lane-dense (block-diagonal) MXU path -- default for small C*S; grid=(2,).
    out_dense = jax.block_until_ready(demixing_forward(x, w, b_in))
    assert out_dense.shape == ref.shape == (B, C)
    assert jnp.allclose(out_dense, ref, atol=1e-4, rtol=1e-4), "dense path mismatch"

    # Tall (B*C, S) MXU path -- the fallback for large C*S; exercised here too.
    out_tall = jax.block_until_ready(demixing_forward(x, w, b_in, force_tall=True))
    assert out_tall.shape == (B, C)
    assert jnp.allclose(out_tall, ref, atol=1e-4, rtol=1e-4), "tall path mismatch"

    print("KERNEL_OK")
</pallas_src>

<mosaic_0001>
module attributes {stable_mosaic.version = 11 : i64} {
  func.func @_demix_kernel(%arg0: i32, %arg1: memref<8x256xf32, #tpu.memory_space<vmem>>, %arg2: memref<256x16xf32, #tpu.memory_space<vmem>>, %arg3: memref<1x16xf32, #tpu.memory_space<vmem>>, %arg4: memref<8x16xf32, #tpu.memory_space<vmem>>) attributes {dimension_semantics = [#tpu.dimension_semantics<parallel>], iteration_bounds = array<i64: 2>, scalar_prefetch = 0 : i64, scratch_operands = 0 : i64, tpu.core_type = #tpu.core_type<tc>, window_params = [{transform_indices = @transform_0, window_bounds = array<i64: 8, 256>}, {pipeline_mode = #tpu.pipeline_mode<synchronous>, transform_indices = @transform_1, window_bounds = array<i64: 256, 16>}, {pipeline_mode = #tpu.pipeline_mode<synchronous>, transform_indices = @transform_2, window_bounds = array<i64: 1, 16>}, {transform_indices = @transform_3, window_bounds = array<i64: 8, 16>}]} {
    %c0 = arith.constant 0 : index
    %c0_0 = arith.constant 0 : index
    %0 = vector.load %arg1[%c0, %c0_0] : memref<8x256xf32, #tpu.memory_space<vmem>>, vector<8x256xf32>
    %c0_1 = arith.constant 0 : index
    %c0_2 = arith.constant 0 : index
    %1 = vector.load %arg2[%c0_1, %c0_2] : memref<256x16xf32, #tpu.memory_space<vmem>>, vector<256x16xf32>
    %cst = arith.constant dense<0.000000e+00> : vector<8x16xf32>
    %2 = tpu.matmul %0, %1, %cst {dimension_numbers = #tpu.dot_dimension_numbers<[1], [0], [0], [1], [0, 0, 1, 1], [], []>, precision = #tpu.contract_precision<fp32>} : vector<8x256xf32>, vector<256x16xf32>, vector<8x16xf32> -> vector<8x16xf32>
    %c0_3 = arith.constant 0 : index
    %c0_4 = arith.constant 0 : index
    %3 = vector.load %arg3[%c0_3, %c0_4] : memref<1x16xf32, #tpu.memory_space<vmem>>, vector<1x16xf32>
    %4 = vector.broadcast %3 : vector<1x16xf32> to vector<8x16xf32>
    %5 = arith.addf %2, %4 : vector<8x16xf32>
    %c0_5 = arith.constant 0 : index
    %c0_6 = arith.constant 0 : index
    %6 = vector.load %arg4[%c0_5, %c0_6] : memref<8x16xf32, #tpu.memory_space<vmem>>, vector<8x16xf32>
    tpu.vector_store %arg4[%c0_5, %c0_6], %5 {strides = array<i32>} : memref<8x16xf32, #tpu.memory_space<vmem>>, vector<8x16xf32>,
    return
  }
  func.func @transform_0(%arg0: i32) -> (i32, i32) {
    %c0_i32 = arith.constant 0 : i32
    %c0_i32_0 = arith.constant 0 : i32
    return %arg0, %c0_i32 : i32, i32
  }
  func.func @transform_1(%arg0: i32) -> (i32, i32) {
    %c0_i32 = arith.constant 0 : i32
    %c0_i32_0 = arith.constant 0 : i32
    %c0_i32_1 = arith.constant 0 : i32
    return %c0_i32, %c0_i32_0 : i32, i32
  }
  func.func @transform_2(%arg0: i32) -> (i32, i32) {
    %c0_i32 = arith.constant 0 : i32
    %c0_i32_0 = arith.constant 0 : i32
    %c0_i32_1 = arith.constant 0 : i32
    return %c0_i32, %c0_i32_0 : i32, i32
  }
  func.func @transform_3(%arg0: i32) -> (i32, i32) {
    %c0_i32 = arith.constant 0 : i32
    %c0_i32_0 = arith.constant 0 : i32
    return %arg0, %c0_i32 : i32, i32
  }
}

</mosaic_0001>

<llo_original>
// kernel: tpu_custom_call.1
$region0: #{tpu_custom_call.1}
  #allocation0 [shape = 'u32[]', space=smem, size = 0x4, offset = 0x4, fixed_abs, tag = 'smem constant byte address 0x4 - core index']
  #allocation1 [shape = 'u32[144,128]{1,0:T(1,128)}', space=vmem, size = 0x12000, scoped, tag = 'internal scratch']
  %s0 = inlined_call_operand.vmem [shape: f32[16,256], index: 0, kind: input, shape index: {}]
  %s1 = inlined_call_operand.vmem [shape: f32[256,16], index: 1, kind: input, shape index: {}]
  %s2 = inlined_call_operand.vmem [shape: f32[1,16], index: 2, kind: input, shape index: {}]
  %s3 = inlined_call_operand.hbm [shape: f32[16,16], index: 3, kind: output, shape index: {}]
  %s4 = sld [smem:[#allocation0]]
  $region45: #{tpu_custom_call.1} parent=0
    _
  %s6 = ssub.s32 1, %s4
  %s7 = scalar_select 0, %s6, %s4
  $region1: #{tpu_custom_call.1} parent=0
    #allocation2 [shape = 'u8[8192]{0}', space=vmem, size = 0x2000, scoped, tag = 'output window, operand 0']
    #allocation3 [shape = 's32[2]{0}', space=sflag, size = 0x8, scoped, tag = 'scoped memory for tpu_custom_call.1']
    %8 = vsyncpa [#allocation3], 0
    %s9 = scalar_lea.sflag [#allocation3], 1
    %10 = vsyncpa %s9, 0
    loop: start=0, step=1, limit=4
    $region2: #{tpu_custom_call.1} parent=1 // loop_pre_header
      _
    $region3: #{tpu_custom_call.1} parent=1 // loop_header
      %s12 = sphi 0, %s16
      %p13 = scmp.ge.s32.totalorder %s12, 4
      %s22 = sphi 0, %s24
      %s25 = sphi 0, %s22
      %s26 = sphi 0, %s25
      %s42 = sphi 0, %s26
      %s46 = sphi 0, %s46
      %s48 = sphi 0, %s46
      %s49 = sphi 0, %s48
      %s63 = sphi 0, %s49
      %s67 = sphi 0, %s67
      %s69 = sphi 0, %s67
      %s70 = sphi 0, %s69
      %s84 = sphi 0, %s70
      %s90 = sphi 0, %s92
      %s93 = sphi 0, %s90
      %s94 = sphi 0, %s93
      %s110 = sphi 0, %s94
    $region4: #{tpu_custom_call.1} parent=1 // loop_header_branch
      %15 = sbr.rel (%p13) target = $region8
    $region5: #{tpu_custom_call.1} parent=1 // loop_body
      %s17 = ssub.s32 %s12, 1
      %s18 = ssub.s32 %s12, 2
      %s19 = sadd.s32 %s12, 1
      %s20 = ssub.s32 %s12, %s19
      %p21 = scmp.eq.s32.totalorder %s20, 0
      %s23 = sadd.s32 %s22, 1
      %s24 = scalar_select %p21, %s22, %s23
      %p27 = pneg %p21
      %p28 = scmp.eq.s32.totalorder %s12, 1
      %p29 = por %p27, %p28
      %p30 = scmp.ne.s32.totalorder %s22, %s25
      %p31 = scmp.eq.s32.totalorder %s12, 0
      %p32 = por %p30, %p31
      %p33 = scmp.ne.s32.totalorder %s22, %s25
      %p34 = scmp.eq.s32.totalorder %s17, 1
      %p35 = por %p33, %p34
      %p36 = scmp.ne.s32.totalorder %s25, %s26
      %p37 = scmp.eq.s32.totalorder %s17, 0
      %p38 = por %p36, %p37
      %p39 = scmp.ne.s32.totalorder %s25, %s26
      %p40 = scmp.eq.s32.totalorder %s18, 1
      %p41 = por %p39, %p40
      %p43 = scmp.ne.s32.totalorder %s26, %s42
      %p44 = scmp.eq.s32.totalorder %s18, 0
      %p45 = por %p43, %p44
      %s47 = sadd.s32 %s46, 1
      %p50 = scmp.eq.s32.totalorder %s12, 1
      %p51 = scmp.ne.s32.totalorder %s46, %s48
      %p52 = scmp.eq.s32.totalorder %s12, 0
      %p53 = por %p51, %p52
      %p54 = scmp.ne.s32.totalorder %s46, %s48
      %p55 = scmp.eq.s32.totalorder %s17, 1
      %p56 = por %p54, %p55
      %p57 = scmp.ne.s32.totalorder %s48, %s49
      %p58 = scmp.eq.s32.totalorder %s17, 0
      %p59 = por %p57, %p58
      %p60 = scmp.ne.s32.totalorder %s48, %s49
      %p61 = scmp.eq.s32.totalorder %s18, 1
      %p62 = por %p60, %p61
      %p64 = scmp.ne.s32.totalorder %s49, %s63
      %p65 = scmp.eq.s32.totalorder %s18, 0
      %p66 = por %p64, %p65
      %s68 = sadd.s32 %s67, 1
      %p71 = scmp.eq.s32.totalorder %s12, 1
      %p72 = scmp.ne.s32.totalorder %s67, %s69
      %p73 = scmp.eq.s32.totalorder %s12, 0
      %p74 = por %p72, %p73
      %p75 = scmp.ne.s32.totalorder %s67, %s69
      %p76 = scmp.eq.s32.totalorder %s17, 1
      %p77 = por %p75, %p76
      %p78 = scmp.ne.s32.totalorder %s69, %s70
      %p79 = scmp.eq.s32.totalorder %s17, 0
      %p80 = por %p78, %p79
      %p81 = scmp.ne.s32.totalorder %s69, %s70
      %p82 = scmp.eq.s32.totalorder %s18, 1
      %p83 = por %p81, %p82
      %p85 = scmp.ne.s32.totalorder %s70, %s84
      %p86 = scmp.eq.s32.totalorder %s18, 0
      %p87 = por %p85, %p86
      %s88 = ssub.s32 %s12, %s19
      %p89 = scmp.eq.s32.totalorder %s88, 0
      %s91 = sadd.s32 %s90, 1
      %s92 = scalar_select %p89, %s90, %s91
      %p95 = pneg %p89
      %p96 = scmp.eq.s32.totalorder %s12, 1
      %p97 = por %p95, %p96
      %p98 = scmp.ne.s32.totalorder %s90, %s93
      %p99 = scmp.eq.s32.totalorder %s12, 0
      %p100 = por %p98, %p99
      %p101 = scmp.ne.s32.totalorder %s90, %s93
      %p102 = scmp.eq.s32.totalorder %s17, 1
      %p103 = por %p101, %p102
      %p104 = scmp.ne.s32.totalorder %s93, %s94
      %p105 = scmp.eq.s32.totalorder %s17, 0
      %p106 = por %p104, %p105
      %p107 = scmp.ne.s32.totalorder %s93, %s94
      %p108 = scmp.eq.s32.totalorder %s18, 1
      %p109 = por %p107, %p108
      %p111 = scmp.ne.s32.totalorder %s94, %s110
      %p112 = scmp.eq.s32.totalorder %s18, 0
      %p113 = por %p111, %p112
      %p114 = scmp.le.s32.totalorder 1, %s12
      %p115 = scmp.lt.s32.totalorder %s12, 3
      %p116 = pnand %p114, %p115
      %p117 = pneg %p116
      // Predicated region
      $region9: #{tpu_custom_call.1} parent=5 // pred_check
        _
      $region10: #{tpu_custom_call.1} parent=5 // pred_check_branch
        %119 = sbr.rel (%p116) target = $region12
      $region11: #{tpu_custom_call.1} parent=5 // pred_region
        %s120 = ssub.s32 %s12, 1
        // Predicated region
        $region13: #{tpu_custom_call.1} parent=11 // pred_check
          %p121 = pneg %p59
        $region14: #{tpu_custom_call.1} parent=11 // pred_check_branch
          %123 = sbr.rel (%p121) target = $region16
        $region15: #{tpu_custom_call.1} parent=11 // pred_region
          _
        $region16: #{tpu_custom_call.1} parent=11 // pred_fallthru
          _
        // Predicated region
        $region17: #{tpu_custom_call.1} parent=11 // pred_check
          %p124 = pneg %p80
        $region18: #{tpu_custom_call.1} parent=11 // pred_check_branch
          %126 = sbr.rel (%p124) target = $region20
        $region19: #{tpu_custom_call.1} parent=11 // pred_region
          _
        $region20: #{tpu_custom_call.1} parent=11 // pred_fallthru
          _
      $region12: #{tpu_custom_call.1} parent=5 // pred_fallthru
        _
      %p127 = scmp.lt.s32.totalorder %s12, 2
      // Predicated region
      $region21: #{tpu_custom_call.1} parent=5 // pred_check
        %p128 = pneg %p127
      $region22: #{tpu_custom_call.1} parent=5 // pred_check_branch
        %130 = sbr.rel (%p128) target = $region24
      $region23: #{tpu_custom_call.1} parent=5 // pred_region
        // Predicated region
        $region25: #{tpu_custom_call.1} parent=23 // pred_check
          %p131 = pneg %p32
        $region26: #{tpu_custom_call.1} parent=23 // pred_check_branch
          %133 = sbr.rel (%p131) target = $region28
        $region27: #{tpu_custom_call.1} parent=23 // pred_region
          %p134 = scmp.lt.s32.totalorder %s12, 1
          %s135 = scalar_select %p134, %s12, 1
          %s136 = smul.addr %s135, 2
          %s137 = smul.addr %s136, 8
          %s138 = scalar_lea.vmem %s0, %s137
        $region28: #{tpu_custom_call.1} parent=23 // pred_fallthru
          _
      $region24: #{tpu_custom_call.1} parent=5 // pred_fallthru
        _
      %p139 = scmp.le.s32.totalorder 1, %s12
      %p140 = scmp.lt.s32.totalorder %s12, 3
      %p141 = pnand %p139, %p140
      %p142 = pneg %p141
      // Predicated region
      $region29: #{tpu_custom_call.1} parent=5 // pred_check
        _
      $region30: #{tpu_custom_call.1} parent=5 // pred_check_branch
        %144 = sbr.rel (%p141) target = $region32
      $region31: #{tpu_custom_call.1} parent=5 // pred_region
        %s145 = ssub.s32 %s12, 1
        %p146 = scmp.lt.s32.totalorder %s17, 1
        %s147 = scalar_select %p146, %s17, 1
        %s148 = smul.addr %s147, 2
        %s149 = smul.addr %s148, 8
        %s150 = scalar_lea.vmem %s0, %s149
        %p151 = pneg %p38
        %p152 = pneg %p35
        %p153 = pneg %p59
        %p154 = pneg %p56
        %p155 = pneg %p80
        %p156 = pneg %p77
        %p157 = pneg %p106
        %p158 = pneg %p103
        %s159 = sand.u32 %s93, 1
        %s160 = scalar_lea.sflag [#allocation3], %s159
        %s161 = sand.u32 %s93, 1
        %s162 = smul.addr %s161, 8
        %s163 = scalar_lea.vmem [#allocation2], %s162
        %p164 = scmp.lt.s32.totalorder %s17, 1
        %s165 = scalar_select %p164, %s17, 1
        %s166 = smul.addr %s165, 2
        %s167 = smul.addr %s166, 8
        %s168 = scalar_lea.vmem %s0, %s167
        %v169 = vld [vmem:[%s168] sm:$0xff]
        %v170 = vld [vmem:[%s168 + $0x8] sm:$0xff]
        %v171 = vld [vmem:[%s1] sm:$0xff]
        %v172 = vld [vmem:[%s1 + $0x8] sm:$0xff]
        %v173 = vld [vmem:[%s1 + $0x10] sm:$0xff]
        %v174 = vld [vmem:[%s1 + $0x18] sm:$0xff]
        %v175 = vld [vmem:[%s1 + $0x20] sm:$0xff]
        %v176 = vld [vmem:[%s1 + $0x28] sm:$0xff]
        %v177 = vld [vmem:[%s1 + $0x30] sm:$0xff]
        %v178 = vld [vmem:[%s1 + $0x38] sm:$0xff]
        %v179 = vld [vmem:[%s1 + $0x40] sm:$0xff]
        %v180 = vld [vmem:[%s1 + $0x48] sm:$0xff]
        %v181 = vld [vmem:[%s1 + $0x50] sm:$0xff]
        %v182 = vld [vmem:[%s1 + $0x58] sm:$0xff]
        %v183 = vld [vmem:[%s1 + $0x60] sm:$0xff]
        %v184 = vld [vmem:[%s1 + $0x68] sm:$0xff]
        %v185 = vld [vmem:[%s1 + $0x70] sm:$0xff]
        %v186 = vld [vmem:[%s1 + $0x78] sm:$0xff]
        %v187 = vld [vmem:[%s1 + $0x80] sm:$0xff]
        %v188 = vld [vmem:[%s1 + $0x88] sm:$0xff]
        %v189 = vld [vmem:[%s1 + $0x90] sm:$0xff]
        %v190 = vld [vmem:[%s1 + $0x98] sm:$0xff]
        %v191 = vld [vmem:[%s1 + $0xa0] sm:$0xff]
        %v192 = vld [vmem:[%s1 + $0xa8] sm:$0xff]
        %v193 = vld [vmem:[%s1 + $0xb0] sm:$0xff]
        %v194 = vld [vmem:[%s1 + $0xb8] sm:$0xff]
        %v195 = vld [vmem:[%s1 + $0xc0] sm:$0xff]
        %v196 = vld [vmem:[%s1 + $0xc8] sm:$0xff]
        %v197 = vld [vmem:[%s1 + $0xd0] sm:$0xff]
        %v198 = vld [vmem:[%s1 + $0xd8] sm:$0xff]
        %v199 = vld [vmem:[%s1 + $0xe0] sm:$0xff]
        %v200 = vld [vmem:[%s1 + $0xe8] sm:$0xff]
        %v201 = vld [vmem:[%s1 + $0xf0] sm:$0xff]
        %v202 = vld [vmem:[%s1 + $0xf8] sm:$0xff]
        %v203 = vld [vmem:[%s2] sm:$0x1]
        %v205 = vlaneseq
        %v206 = vshrl.u32 %v205, 7
        %v207 = vsub.s32 0, %v206
        %v208 = vrot.slane %v203, %v207
        %210 = vmatprep.subr.mxu0 0.0
        %v211 = vand.u32 %v186, 4294901760
        %212 = vmatpush1.msra.mxu0 %v211
        %213 = vmatprep.subr.mxu0 0.0
        %v214 = vand.u32 %v185, 4294901760
        %215 = vmatpush1.msra.mxu0 %v214
        %216 = vmatprep.subr.mxu0 0.0
        %v217 = vand.u32 %v184, 4294901760
        %218 = vmatpush1.msra.mxu0 %v217
        %219 = vmatprep.subr.mxu0 0.0
        %v220 = vand.u32 %v183, 4294901760
        %221 = vmatpush1.msra.mxu0 %v220
        %222 = vmatprep.subr.mxu0 0.0
        %v223 = vand.u32 %v182, 4294901760
        %224 = vmatpush1.msra.mxu0 %v223
        %225 = vmatprep.subr.mxu0 0.0
        %v226 = vand.u32 %v181, 4294901760
        %227 = vmatpush1.msra.mxu0 %v226
        %228 = vmatprep.subr.mxu0 0.0
        %v229 = vand.u32 %v180, 4294901760
        %230 = vmatpush1.msra.mxu0 %v229
        %231 = vmatprep.subr.mxu0 0.0
        %v232 = vand.u32 %v179, 4294901760
        %233 = vmatpush1.msra.mxu0 %v232
        %234 = vmatprep.subr.mxu0 0.0
        %v235 = vand.u32 %v178, 4294901760
        %236 = vmatpush1.msra.mxu0 %v235
        %237 = vmatprep.subr.mxu0 0.0
        %v238 = vand.u32 %v177, 4294901760
        %239 = vmatpush1.msra.mxu0 %v238
        %240 = vmatprep.subr.mxu0 0.0
        %v241 = vand.u32 %v176, 4294901760
        %242 = vmatpush1.msra.mxu0 %v241
        %243 = vmatprep.subr.mxu0 0.0
        %v244 = vand.u32 %v175, 4294901760
        %245 = vmatpush1.msra.mxu0 %v244
        %246 = vmatprep.subr.mxu0 0.0
        %v247 = vand.u32 %v174, 4294901760
        %248 = vmatpush1.msra.mxu0 %v247
        %249 = vmatprep.subr.mxu0 0.0
        %v250 = vand.u32 %v173, 4294901760
        %251 = vmatpush1.msra.mxu0 %v250
        %252 = vmatprep.subr.mxu0 0.0
        %v253 = vand.u32 %v172, 4294901760
        %254 = vmatpush1.msra.mxu0 %v253
        %255 = vmatprep.subr.mxu0 0.0
        %v256 = vand.u32 %v171, 4294901760
        %257 = vmatpush1.msra.mxu0 %v256
        %258 = vmatprep.subr.mxu0 0.0
        %v259 = vand.u32 %v202, 4294901760
        %260 = vmatpush2.msra.mxu0 %v259
        %261 = vmatprep.subr.mxu0 0.0
        %v262 = vand.u32 %v201, 4294901760
        %263 = vmatpush2.msra.mxu0 %v262
        %264 = vmatprep.subr.mxu0 0.0
        %v265 = vand.u32 %v200, 4294901760
        %266 = vmatpush2.msra.mxu0 %v265
        %267 = vmatprep.subr.mxu0 0.0
        %v268 = vand.u32 %v199, 4294901760
        %269 = vmatpush2.msra.mxu0 %v268
        %270 = vmatprep.subr.mxu0 0.0
        %v271 = vand.u32 %v198, 4294901760
        %272 = vmatpush2.msra.mxu0 %v271
        %273 = vmatprep.subr.mxu0 0.0
        %v274 = vand.u32 %v197, 4294901760
        %275 = vmatpush2.msra.mxu0 %v274
        %276 = vmatprep.subr.mxu0 0.0
        %v277 = vand.u32 %v196, 4294901760
        %278 = vmatpush2.msra.mxu0 %v277
        %279 = vmatprep.subr.mxu0 0.0
        %v280 = vand.u32 %v195, 4294901760
        %281 = vmatpush2.msra.mxu0 %v280
        %282 = vmatprep.subr.mxu0 0.0
        %v283 = vand.u32 %v194, 4294901760
        %284 = vmatpush2.msra.mxu0 %v283
        %285 = vmatprep.subr.mxu0 0.0
        %v286 = vand.u32 %v193, 4294901760
        %287 = vmatpush2.msra.mxu0 %v286
        %288 = vmatprep.subr.mxu0 0.0
        %v289 = vand.u32 %v192, 4294901760
        %290 = vmatpush2.msra.mxu0 %v289
        %291 = vmatprep.subr.mxu0 0.0
        %v292 = vand.u32 %v191, 4294901760
        %293 = vmatpush2.msra.mxu0 %v292
        %294 = vmatprep.subr.mxu0 0.0
        %v295 = vand.u32 %v190, 4294901760
        %296 = vmatpush2.msra.mxu0 %v295
        %297 = vmatprep.subr.mxu0 0.0
        %v298 = vand.u32 %v189, 4294901760
        %299 = vmatpush2.msra.mxu0 %v298
        %300 = vmatprep.subr.mxu0 0.0
        %v301 = vand.u32 %v188, 4294901760
        %302 = vmatpush2.msra.mxu0 %v301
        %303 = vmatprep.subr.mxu0 0.0
        %v304 = vand.u32 %v187, 4294901760
        %305 = vmatpush2.msra.mxu0 %v304
        %v306 = vand.u32 %v170, 4294901760
        %v307 = vsub.f32 %v170, %v306
        %v308 = vand.u32 %v307, 4294901760
        %v309 = vsub.f32 %v307, %v308
        %v310 = vand.u32 %v309, 4294901760
        %311 = vmatprep.mubr.f32.mxu0 %v310
        %v312 = vand.u32 %v169, 4294901760
        %v313 = vsub.f32 %v169, %v312
        %v314 = vand.u32 %v313, 4294901760
        %v315 = vsub.f32 %v313, %v314
        %v316 = vand.u32 %v315, 4294901760
        %317 = vmatmul.mubr.f32.gmra.mxu0 %v316
        %v318 = vpop.f32.mrf.mxu0
        %v319 = vadd.f32 %v208, %v318
        %v320 = vpop.f32.mrf.mxu0
        %321 = vdwg.mxu0
        %322 = vmatprep.subr.mxu0 0.0
        %v323 = vand.u32 %v186, 4294901760
        %v324 = vsub.f32 %v186, %v323
        %v325 = vand.u32 %v324, 4294901760
        %v326 = vsub.f32 %v324, %v325
        %v327 = vand.u32 %v326, 4294901760
        %328 = vmatpush1.msra.mxu0 %v327
        %329 = vmatprep.subr.mxu0 0.0
        %v330 = vand.u32 %v185, 4294901760
        %v331 = vsub.f32 %v185, %v330
        %v332 = vand.u32 %v331, 4294901760
        %v333 = vsub.f32 %v331, %v332
        %v334 = vand.u32 %v333, 4294901760
        %335 = vmatpush1.msra.mxu0 %v334
        %336 = vmatprep.subr.mxu0 0.0
        %v337 = vand.u32 %v184, 4294901760
        %v338 = vsub.f32 %v184, %v337
        %v339 = vand.u32 %v338, 4294901760
        %v340 = vsub.f32 %v338, %v339
        %v341 = vand.u32 %v340, 4294901760
        %342 = vmatpush1.msra.mxu0 %v341
        %343 = vmatprep.subr.mxu0 0.0
        %v344 = vand.u32 %v183, 4294901760
        %v345 = vsub.f32 %v183, %v344
        %v346 = vand.u32 %v345, 4294901760
        %v347 = vsub.f32 %v345, %v346
        %v348 = vand.u32 %v347, 4294901760
        %349 = vmatpush1.msra.mxu0 %v348
        %350 = vmatprep.subr.mxu0 0.0
        %v351 = vand.u32 %v182, 4294901760
        %v352 = vsub.f32 %v182, %v351
        %v353 = vand.u32 %v352, 4294901760
        %v354 = vsub.f32 %v352, %v353
        %v355 = vand.u32 %v354, 4294901760
        %356 = vmatpush1.msra.mxu0 %v355
        %357 = vmatprep.subr.mxu0 0.0
        %v358 = vand.u32 %v181, 4294901760
        %v359 = vsub.f32 %v181, %v358
        %v360 = vand.u32 %v359, 4294901760
        %v361 = vsub.f32 %v359, %v360
        %v362 = vand.u32 %v361, 4294901760
        %363 = vmatpush1.msra.mxu0 %v362
        %364 = vmatprep.subr.mxu0 0.0
        %v365 = vand.u32 %v180, 4294901760
        %v366 = vsub.f32 %v180, %v365
        %v367 = vand.u32 %v366, 4294901760
        %v368 = vsub.f32 %v366, %v367
        %v369 = vand.u32 %v368, 4294901760
        %370 = vmatpush1.msra.mxu0 %v369
        %371 = vmatprep.subr.mxu0 0.0
        %v372 = vand.u32 %v179, 4294901760
        %v373 = vsub.f32 %v179, %v372
        %v374 = vand.u32 %v373, 4294901760
        %v375 = vsub.f32 %v373, %v374
        %v376 = vand.u32 %v375, 4294901760
        %377 = vmatpush1.msra.mxu0 %v376
        %378 = vmatprep.subr.mxu0 0.0
        %v379 = vand.u32 %v178, 4294901760
        %v380 = vsub.f32 %v178, %v379
        %v381 = vand.u32 %v380, 4294901760
        %v382 = vsub.f32 %v380, %v381
        %v383 = vand.u32 %v382, 4294901760
        %384 = vmatpush1.msra.mxu0 %v383
        %385 = vmatprep.subr.mxu0 0.0
        %v386 = vand.u32 %v177, 4294901760
        %v387 = vsub.f32 %v177, %v386
        %v388 = vand.u32 %v387, 4294901760
        %v389 = vsub.f32 %v387, %v388
        %v390 = vand.u32 %v389, 4294901760
        %391 = vmatpush1.msra.mxu0 %v390
        %392 = vmatprep.subr.mxu0 0.0
        %v393 = vand.u32 %v176, 4294901760
        %v394 = vsub.f32 %v176, %v393
        %v395 = vand.u32 %v394, 4294901760
        %v396 = vsub.f32 %v394, %v395
        %v397 = vand.u32 %v396, 4294901760
        %398 = vmatpush1.msra.mxu0 %v397
        %399 = vmatprep.subr.mxu0 0.0
        %v400 = vand.u32 %v175, 4294901760
        %v401 = vsub.f32 %v175, %v400
        %v402 = vand.u32 %v401, 4294901760
        %v403 = vsub.f32 %v401, %v402
        %v404 = vand.u32 %v403, 4294901760
        %405 = vmatpush1.msra.mxu0 %v404
        %406 = vmatprep.subr.mxu0 0.0
        %v407 = vand.u32 %v174, 4294901760
        %v408 = vsub.f32 %v174, %v407
        %v409 = vand.u32 %v408, 4294901760
        %v410 = vsub.f32 %v408, %v409
        %v411 = vand.u32 %v410, 4294901760
        %412 = vmatpush1.msra.mxu0 %v411
        %413 = vmatprep.subr.mxu0 0.0
        %v414 = vand.u32 %v173, 4294901760
        %v415 = vsub.f32 %v173, %v414
        %v416 = vand.u32 %v415, 4294901760
        %v417 = vsub.f32 %v415, %v416
        %v418 = vand.u32 %v417, 4294901760
        %419 = vmatpush1.msra.mxu0 %v418
        %420 = vmatprep.subr.mxu0 0.0
        %v421 = vand.u32 %v172, 4294901760
        %v422 = vsub.f32 %v172, %v421
        %v423 = vand.u32 %v422, 4294901760
        %v424 = vsub.f32 %v422, %v423
        %v425 = vand.u32 %v424, 4294901760
        %426 = vmatpush1.msra.mxu0 %v425
        %427 = vmatprep.subr.mxu0 0.0
        %v428 = vand.u32 %v171, 4294901760
        %v429 = vsub.f32 %v171, %v428
        %v430 = vand.u32 %v429, 4294901760
        %v431 = vsub.f32 %v429, %v430
        %v432 = vand.u32 %v431, 4294901760
        %433 = vmatpush1.msra.mxu0 %v432
        %434 = vmatprep.subr.mxu0 0.0
        %v435 = vand.u32 %v202, 4294901760
        %v436 = vsub.f32 %v202, %v435
        %v437 = vand.u32 %v436, 4294901760
        %v438 = vsub.f32 %v436, %v437
        %v439 = vand.u32 %v438, 4294901760
        %440 = vmatpush2.msra.mxu0 %v439
        %441 = vmatprep.subr.mxu0 0.0
        %v442 = vand.u32 %v201, 4294901760
        %v443 = vsub.f32 %v201, %v442
        %v444 = vand.u32 %v443, 4294901760
        %v445 = vsub.f32 %v443, %v444
        %v446 = vand.u32 %v445, 4294901760
        %447 = vmatpush2.msra.mxu0 %v446
        %448 = vmatprep.subr.mxu0 0.0
        %v449 = vand.u32 %v200, 4294901760
        %v450 = vsub.f32 %v200, %v449
        %v451 = vand.u32 %v450, 4294901760
        %v452 = vsub.f32 %v450, %v451
        %v453 = vand.u32 %v452, 4294901760
        %454 = vmatpush2.msra.mxu0 %v453
        %455 = vmatprep.subr.mxu0 0.0
        %v456 = vand.u32 %v199, 4294901760
        %v457 = vsub.f32 %v199, %v456
        %v458 = vand.u32 %v457, 4294901760
        %v459 = vsub.f32 %v457, %v458
        %v460 = vand.u32 %v459, 4294901760
        %461 = vmatpush2.msra.mxu0 %v460
        %462 = vmatprep.subr.mxu0 0.0
        %v463 = vand.u32 %v198, 4294901760
        %v464 = vsub.f32 %v198, %v463
        %v465 = vand.u32 %v464, 4294901760
        %v466 = vsub.f32 %v464, %v465
        %v467 = vand.u32 %v466, 4294901760
        %468 = vmatpush2.msra.mxu0 %v467
        %469 = vmatprep.subr.mxu0 0.0
        %v470 = vand.u32 %v197, 4294901760
        %v471 = vsub.f32 %v197, %v470
        %v472 = vand.u32 %v471, 4294901760
        %v473 = vsub.f32 %v471, %v472
        %v474 = vand.u32 %v473, 4294901760
        %475 = vmatpush2.msra.mxu0 %v474
        %476 = vmatprep.subr.mxu0 0.0
        %v477 = vand.u32 %v196, 4294901760
        %v478 = vsub.f32 %v196, %v477
        %v479 = vand.u32 %v478, 4294901760
        %v480 = vsub.f32 %v478, %v479
        %v481 = vand.u32 %v480, 4294901760
        %482 = vmatpush2.msra.mxu0 %v481
        %483 = vmatprep.subr.mxu0 0.0
        %v484 = vand.u32 %v195, 4294901760
        %v485 = vsub.f32 %v195, %v484
        %v486 = vand.u32 %v485, 4294901760
        %v487 = vsub.f32 %v485, %v486
        %v488 = vand.u32 %v487, 4294901760
        %489 = vmatpush2.msra.mxu0 %v488
        %490 = vmatprep.subr.mxu0 0.0
        %v491 = vand.u32 %v194, 4294901760
        %v492 = vsub.f32 %v194, %v491
        %v493 = vand.u32 %v492, 4294901760
        %v494 = vsub.f32 %v492, %v493
        %v495 = vand.u32 %v494, 4294901760
        %496 = vmatpush2.msra.mxu0 %v495
        %497 = vmatprep.subr.mxu0 0.0
        %v498 = vand.u32 %v193, 4294901760
        %v499 = vsub.f32 %v193, %v498
        %v500 = vand.u32 %v499, 4294901760
        %v501 = vsub.f32 %v499, %v500
        %v502 = vand.u32 %v501, 4294901760
        %503 = vmatpush2.msra.mxu0 %v502
        %504 = vmatprep.subr.mxu0 0.0
        %v505 = vand.u32 %v192, 4294901760
        %v506 = vsub.f32 %v192, %v505
        %v507 = vand.u32 %v506, 4294901760
        %v508 = vsub.f32 %v506, %v507
        %v509 = vand.u32 %v508, 4294901760
        %510 = vmatpush2.msra.mxu0 %v509
        %511 = vmatprep.subr.mxu0 0.0
        %v512 = vand.u32 %v191, 4294901760
        %v513 = vsub.f32 %v191, %v512
        %v514 = vand.u32 %v513, 4294901760
        %v515 = vsub.f32 %v513, %v514
        %v516 = vand.u32 %v515, 4294901760
        %517 = vmatpush2.msra.mxu0 %v516
        %518 = vmatprep.subr.mxu0 0.0
        %v519 = vand.u32 %v190, 4294901760
        %v520 = vsub.f32 %v190, %v519
        %v521 = vand.u32 %v520, 4294901760
        %v522 = vsub.f32 %v520, %v521
        %v523 = vand.u32 %v522, 4294901760
        %524 = vmatpush2.msra.mxu0 %v523
        %525 = vmatprep.subr.mxu0 0.0
        %v526 = vand.u32 %v189, 4294901760
        %v527 = vsub.f32 %v189, %v526
        %v528 = vand.u32 %v527, 4294901760
        %v529 = vsub.f32 %v527, %v528
        %v530 = vand.u32 %v529, 4294901760
        %531 = vmatpush2.msra.mxu0 %v530
        %532 = vmatprep.subr.mxu0 0.0
        %v533 = vand.u32 %v188, 4294901760
        %v534 = vsub.f32 %v188, %v533
        %v535 = vand.u32 %v534, 4294901760
        %v536 = vsub.f32 %v534, %v535
        %v537 = vand.u32 %v536, 4294901760
        %538 = vmatpush2.msra.mxu0 %v537
        %539 = vmatprep.subr.mxu0 0.0
        %v540 = vand.u32 %v187, 4294901760
        %v541 = vsub.f32 %v187, %v540
        %v542 = vand.u32 %v541, 4294901760
        %v543 = vsub.f32 %v541, %v542
        %v544 = vand.u32 %v543, 4294901760
        %545 = vmatpush2.msra.mxu0 %v544
        %v546 = vand.u32 %v170, 4294901760
        %547 = vmatprep.mubr.f32.mxu0 %v546
        %v548 = vand.u32 %v169, 4294901760
        %549 = vmatmul.mubr.f32.gmra.mxu0 %v548
        %v550 = vpop.f32.mrf.mxu0
        %v551 = vadd.f32 %v319, %v550
        %v552 = vpop.f32.mrf.mxu0
        %553 = vdwg.mxu0
        %554 = vmatprep.subr.mxu0 0.0
        %v555 = vand.u32 %v186, 4294901760
        %v556 = vsub.f32 %v186, %v555
        %557 = vmatpush1.msra.mxu0 %v556
        %558 = vmatprep.subr.mxu0 0.0
        %v559 = vand.u32 %v185, 4294901760
        %v560 = vsub.f32 %v185, %v559
        %561 = vmatpush1.msra.mxu0 %v560
        %562 = vmatprep.subr.mxu0 0.0
        %v563 = vand.u32 %v184, 4294901760
        %v564 = vsub.f32 %v184, %v563
        %565 = vmatpush1.msra.mxu0 %v564
        %566 = vmatprep.subr.mxu0 0.0
        %v567 = vand.u32 %v183, 4294901760
        %v568 = vsub.f32 %v183, %v567
        %569 = vmatpush1.msra.mxu0 %v568
        %570 = vmatprep.subr.mxu0 0.0
        %v571 = vand.u32 %v182, 4294901760
        %v572 = vsub.f32 %v182, %v571
        %573 = vmatpush1.msra.mxu0 %v572
        %574 = vmatprep.subr.mxu0 0.0
        %v575 = vand.u32 %v181, 4294901760
        %v576 = vsub.f32 %v181, %v575
        %577 = vmatpush1.msra.mxu0 %v576
        %578 = vmatprep.subr.mxu0 0.0
        %v579 = vand.u32 %v180, 4294901760
        %v580 = vsub.f32 %v180, %v579
        %581 = vmatpush1.msra.mxu0 %v580
        %582 = vmatprep.subr.mxu0 0.0
        %v583 = vand.u32 %v179, 4294901760
        %v584 = vsub.f32 %v179, %v583
        %585 = vmatpush1.msra.mxu0 %v584
        %586 = vmatprep.subr.mxu0 0.0
        %v587 = vand.u32 %v178, 4294901760
        %v588 = vsub.f32 %v178, %v587
        %589 = vmatpush1.msra.mxu0 %v588
        %590 = vmatprep.subr.mxu0 0.0
        %v591 = vand.u32 %v177, 4294901760
        %v592 = vsub.f32 %v177, %v591
        %593 = vmatpush1.msra.mxu0 %v592
        %594 = vmatprep.subr.mxu0 0.0
        %v595 = vand.u32 %v176, 4294901760
        %v596 = vsub.f32 %v176, %v595
        %597 = vmatpush1.msra.mxu0 %v596
        %598 = vmatprep.subr.mxu0 0.0
        %v599 = vand.u32 %v175, 4294901760
        %v600 = vsub.f32 %v175, %v599
        %601 = vmatpush1.msra.mxu0 %v600
        %602 = vmatprep.subr.mxu0 0.0
        %v603 = vand.u32 %v174, 4294901760
        %v604 = vsub.f32 %v174, %v603
        %605 = vmatpush1.msra.mxu0 %v604
        %606 = vmatprep.subr.mxu0 0.0
        %v607 = vand.u32 %v173, 4294901760
        %v608 = vsub.f32 %v173, %v607
        %609 = vmatpush1.msra.mxu0 %v608
        %610 = vmatprep.subr.mxu0 0.0
        %v611 = vand.u32 %v172, 4294901760
        %v612 = vsub.f32 %v172, %v611
        %613 = vmatpush1.msra.mxu0 %v612
        %614 = vmatprep.subr.mxu0 0.0
        %v615 = vand.u32 %v171, 4294901760
        %v616 = vsub.f32 %v171, %v615
        %617 = vmatpush1.msra.mxu0 %v616
        %618 = vmatprep.subr.mxu0 0.0
        %v619 = vand.u32 %v202, 4294901760
        %v620 = vsub.f32 %v202, %v619
        %621 = vmatpush2.msra.mxu0 %v620
        %622 = vmatprep.subr.mxu0 0.0
        %v623 = vand.u32 %v201, 4294901760
        %v624 = vsub.f32 %v201, %v623
        %625 = vmatpush2.msra.mxu0 %v624
        %626 = vmatprep.subr.mxu0 0.0
        %v627 = vand.u32 %v200, 4294901760
        %v628 = vsub.f32 %v200, %v627
        %629 = vmatpush2.msra.mxu0 %v628
        %630 = vmatprep.subr.mxu0 0.0
        %v631 = vand.u32 %v199, 4294901760
        %v632 = vsub.f32 %v199, %v631
        %633 = vmatpush2.msra.mxu0 %v632
        %634 = vmatprep.subr.mxu0 0.0
        %v635 = vand.u32 %v198, 4294901760
        %v636 = vsub.f32 %v198, %v635
        %637 = vmatpush2.msra.mxu0 %v636
        %638 = vmatprep.subr.mxu0 0.0
        %v639 = vand.u32 %v197, 4294901760
        %v640 = vsub.f32 %v197, %v639
        %641 = vmatpush2.msra.mxu0 %v640
        %642 = vmatprep.subr.mxu0 0.0
        %v643 = vand.u32 %v196, 4294901760
        %v644 = vsub.f32 %v196, %v643
        %645 = vmatpush2.msra.mxu0 %v644
        %646 = vmatprep.subr.mxu0 0.0
        %v647 = vand.u32 %v195, 4294901760
        %v648 = vsub.f32 %v195, %v647
        %649 = vmatpush2.msra.mxu0 %v648
        %650 = vmatprep.subr.mxu0 0.0
        %v651 = vand.u32 %v194, 4294901760
        %v652 = vsub.f32 %v194, %v651
        %653 = vmatpush2.msra.mxu0 %v652
        %654 = vmatprep.subr.mxu0 0.0
        %v655 = vand.u32 %v193, 4294901760
        %v656 = vsub.f32 %v193, %v655
        %657 = vmatpush2.msra.mxu0 %v656
        %658 = vmatprep.subr.mxu0 0.0
        %v659 = vand.u32 %v192, 4294901760
        %v660 = vsub.f32 %v192, %v659
        %661 = vmatpush2.msra.mxu0 %v660
        %662 = vmatprep.subr.mxu0 0.0
        %v663 = vand.u32 %v191, 4294901760
        %v664 = vsub.f32 %v191, %v663
        %665 = vmatpush2.msra.mxu0 %v664
        %666 = vmatprep.subr.mxu0 0.0
        %v667 = vand.u32 %v190, 4294901760
        %v668 = vsub.f32 %v190, %v667
        %669 = vmatpush2.msra.mxu0 %v668
        %670 = vmatprep.subr.mxu0 0.0
        %v671 = vand.u32 %v189, 4294901760
        %v672 = vsub.f32 %v189, %v671
        %673 = vmatpush2.msra.mxu0 %v672
        %674 = vmatprep.subr.mxu0 0.0
        %v675 = vand.u32 %v188, 4294901760
        %v676 = vsub.f32 %v188, %v675
        %677 = vmatpush2.msra.mxu0 %v676
        %678 = vmatprep.subr.mxu0 0.0
        %v679 = vand.u32 %v187, 4294901760
        %v680 = vsub.f32 %v187, %v679
        %681 = vmatpush2.msra.mxu0 %v680
        %v682 = vand.u32 %v170, 4294901760
        %v683 = vsub.f32 %v170, %v682
        %684 = vmatprep.mubr.f32.mxu0 %v683
        %v685 = vand.u32 %v169, 4294901760
        %v686 = vsub.f32 %v169, %v685
        %687 = vmatmul.mubr.f32.gmra.mxu0 %v686
        %v688 = vpop.f32.mrf.mxu0
        %v689 = vadd.f32 %v551, %v688
        %v690 = vpop.f32.mrf.mxu0
        %691 = vdwg.mxu0
        %692 = vmatprep.subr.mxu0 0.0
        %v693 = vand.u32 %v186, 4294901760
        %694 = vmatpush1.msra.mxu0 %v693
        %695 = vmatprep.subr.mxu0 0.0
        %v696 = vand.u32 %v185, 4294901760
        %697 = vmatpush1.msra.mxu0 %v696
        %698 = vmatprep.subr.mxu0 0.0
        %v699 = vand.u32 %v184, 4294901760
        %700 = vmatpush1.msra.mxu0 %v699
        %701 = vmatprep.subr.mxu0 0.0
        %v702 = vand.u32 %v183, 4294901760
        %703 = vmatpush1.msra.mxu0 %v702
        %704 = vmatprep.subr.mxu0 0.0
        %v705 = vand.u32 %v182, 4294901760
        %706 = vmatpush1.msra.mxu0 %v705
        %707 = vmatprep.subr.mxu0 0.0
        %v708 = vand.u32 %v181, 4294901760
        %709 = vmatpush1.msra.mxu0 %v708
        %710 = vmatprep.subr.mxu0 0.0
        %v711 = vand.u32 %v180, 4294901760
        %712 = vmatpush1.msra.mxu0 %v711
        %713 = vmatprep.subr.mxu0 0.0
        %v714 = vand.u32 %v179, 4294901760
        %715 = vmatpush1.msra.mxu0 %v714
        %716 = vmatprep.subr.mxu0 0.0
        %v717 = vand.u32 %v178, 4294901760
        %718 = vmatpush1.msra.mxu0 %v717
        %719 = vmatprep.subr.mxu0 0.0
        %v720 = vand.u32 %v177, 4294901760
        %721 = vmatpush1.msra.mxu0 %v720
        %722 = vmatprep.subr.mxu0 0.0
        %v723 = vand.u32 %v176, 4294901760
        %724 = vmatpush1.msra.mxu0 %v723
        %725 = vmatprep.subr.mxu0 0.0
        %v726 = vand.u32 %v175, 4294901760
        %727 = vmatpush1.msra.mxu0 %v726
        %728 = vmatprep.subr.mxu0 0.0
        %v729 = vand.u32 %v174, 4294901760
        %730 = vmatpush1.msra.mxu0 %v729
        %731 = vmatprep.subr.mxu0 0.0
        %v732 = vand.u32 %v173, 4294901760
        %733 = vmatpush1.msra.mxu0 %v732
        %734 = vmatprep.subr.mxu0 0.0
        %v735 = vand.u32 %v172, 4294901760
        %736 = vmatpush1.msra.mxu0 %v735
        %737 = vmatprep.subr.mxu0 0.0
        %v738 = vand.u32 %v171, 4294901760
        %739 = vmatpush1.msra.mxu0 %v738
        %740 = vmatprep.subr.mxu0 0.0
        %v741 = vand.u32 %v202, 4294901760
        %742 = vmatpush2.msra.mxu0 %v741
        %743 = vmatprep.subr.mxu0 0.0
        %v744 = vand.u32 %v201, 4294901760
        %745 = vmatpush2.msra.mxu0 %v744
        %746 = vmatprep.subr.mxu0 0.0
        %v747 = vand.u32 %v200, 4294901760
        %748 = vmatpush2.msra.mxu0 %v747
        %749 = vmatprep.subr.mxu0 0.0
        %v750 = vand.u32 %v199, 4294901760
        %751 = vmatpush2.msra.mxu0 %v750
        %752 = vmatprep.subr.mxu0 0.0
        %v753 = vand.u32 %v198, 4294901760
        %754 = vmatpush2.msra.mxu0 %v753
        %755 = vmatprep.subr.mxu0 0.0
        %v756 = vand.u32 %v197, 4294901760
        %757 = vmatpush2.msra.mxu0 %v756
        %758 = vmatprep.subr.mxu0 0.0
        %v759 = vand.u32 %v196, 4294901760
        %760 = vmatpush2.msra.mxu0 %v759
        %761 = vmatprep.subr.mxu0 0.0
        %v762 = vand.u32 %v195, 4294901760
        %763 = vmatpush2.msra.mxu0 %v762
        %764 = vmatprep.subr.mxu0 0.0
        %v765 = vand.u32 %v194, 4294901760
        %766 = vmatpush2.msra.mxu0 %v765
        %767 = vmatprep.subr.mxu0 0.0
        %v768 = vand.u32 %v193, 4294901760
        %769 = vmatpush2.msra.mxu0 %v768
        %770 = vmatprep.subr.mxu0 0.0
        %v771 = vand.u32 %v192, 4294901760
        %772 = vmatpush2.msra.mxu0 %v771
        %773 = vmatprep.subr.mxu0 0.0
        %v774 = vand.u32 %v191, 4294901760
        %775 = vmatpush2.msra.mxu0 %v774
        %776 = vmatprep.subr.mxu0 0.0
        %v777 = vand.u32 %v190, 4294901760
        %778 = vmatpush2.msra.mxu0 %v777
        %779 = vmatprep.subr.mxu0 0.0
        %v780 = vand.u32 %v189, 4294901760
        %781 = vmatpush2.msra.mxu0 %v780
        %782 = vmatprep.subr.mxu0 0.0
        %v783 = vand.u32 %v188, 4294901760
        %784 = vmatpush2.msra.mxu0 %v783
        %785 = vmatprep.subr.mxu0 0.0
        %v786 = vand.u32 %v187, 4294901760
        %787 = vmatpush2.msra.mxu0 %v786
        %v788 = vand.u32 %v170, 4294901760
        %v789 = vsub.f32 %v170, %v788
        %v790 = vand.u32 %v789, 4294901760
        %791 = vmatprep.mubr.f32.mxu0 %v790
        %v792 = vand.u32 %v169, 4294901760
        %v793 = vsub.f32 %v169, %v792
        %v794 = vand.u32 %v793, 4294901760
        %795 = vmatmul.mubr.f32.gmra.mxu0 %v794
        %v796 = vpop.f32.mrf.mxu0
        %v797 = vadd.f32 %v689, %v796
        %v798 = vpop.f32.mrf.mxu0
        %799 = vdwg.mxu0
        %800 = vmatprep.subr.mxu0 0.0
        %v801 = vand.u32 %v186, 4294901760
        %v802 = vsub.f32 %v186, %v801
        %v803 = vand.u32 %v802, 4294901760
        %804 = vmatpush1.msra.mxu0 %v803
        %805 = vmatprep.subr.mxu0 0.0
        %v806 = vand.u32 %v185, 4294901760
        %v807 = vsub.f32 %v185, %v806
        %v808 = vand.u32 %v807, 4294901760
        %809 = vmatpush1.msra.mxu0 %v808
        %810 = vmatprep.subr.mxu0 0.0
        %v811 = vand.u32 %v184, 4294901760
        %v812 = vsub.f32 %v184, %v811
        %v813 = vand.u32 %v812, 4294901760
        %814 = vmatpush1.msra.mxu0 %v813
        %815 = vmatprep.subr.mxu0 0.0
        %v816 = vand.u32 %v183, 4294901760
        %v817 = vsub.f32 %v183, %v816
        %v818 = vand.u32 %v817, 4294901760
        %819 = vmatpush1.msra.mxu0 %v818
        %820 = vmatprep.subr.mxu0 0.0
        %v821 = vand.u32 %v182, 4294901760
        %v822 = vsub.f32 %v182, %v821
        %v823 = vand.u32 %v822, 4294901760
        %824 = vmatpush1.msra.mxu0 %v823
        %825 = vmatprep.subr.mxu0 0.0
        %v826 = vand.u32 %v181, 4294901760
        %v827 = vsub.f32 %v181, %v826
        %v828 = vand.u32 %v827, 4294901760
        %829 = vmatpush1.msra.mxu0 %v828
        %830 = vmatprep.subr.mxu0 0.0
        %v831 = vand.u32 %v180, 4294901760
        %v832 = vsub.f32 %v180, %v831
        %v833 = vand.u32 %v832, 4294901760
        %834 = vmatpush1.msra.mxu0 %v833
        %835 = vmatprep.subr.mxu0 0.0
        %v836 = vand.u32 %v179, 4294901760
        %v837 = vsub.f32 %v179, %v836
        %v838 = vand.u32 %v837, 4294901760
        %839 = vmatpush1.msra.mxu0 %v838
        %840 = vmatprep.subr.mxu0 0.0
        %v841 = vand.u32 %v178, 4294901760
        %v842 = vsub.f32 %v178, %v841
        %v843 = vand.u32 %v842, 4294901760
        %844 = vmatpush1.msra.mxu0 %v843
        %845 = vmatprep.subr.mxu0 0.0
        %v846 = vand.u32 %v177, 4294901760
        %v847 = vsub.f32 %v177, %v846
        %v848 = vand.u32 %v847, 4294901760
        %849 = vmatpush1.msra.mxu0 %v848
        %850 = vmatprep.subr.mxu0 0.0
        %v851 = vand.u32 %v176, 4294901760
        %v852 = vsub.f32 %v176, %v851
        %v853 = vand.u32 %v852, 4294901760
        %854 = vmatpush1.msra.mxu0 %v853
        %855 = vmatprep.subr.mxu0 0.0
        %v856 = vand.u32 %v175, 4294901760
        %v857 = vsub.f32 %v175, %v856
        %v858 = vand.u32 %v857, 4294901760
        %859 = vmatpush1.msra.mxu0 %v858
        %860 = vmatprep.subr.mxu0 0.0
        %v861 = vand.u32 %v174, 4294901760
        %v862 = vsub.f32 %v174, %v861
        %v863 = vand.u32 %v862, 4294901760
        %864 = vmatpush1.msra.mxu0 %v863
        %865 = vmatprep.subr.mxu0 0.0
        %v866 = vand.u32 %v173, 4294901760
        %v867 = vsub.f32 %v173, %v866
        %v868 = vand.u32 %v867, 4294901760
        %869 = vmatpush1.msra.mxu0 %v868
        %870 = vmatprep.subr.mxu0 0.0
        %v871 = vand.u32 %v172, 4294901760
        %v872 = vsub.f32 %v172, %v871
        %v873 = vand.u32 %v872, 4294901760
        %874 = vmatpush1.msra.mxu0 %v873
        %875 = vmatprep.subr.mxu0 0.0
        %v876 = vand.u32 %v171, 4294901760
        %v877 = vsub.f32 %v171, %v876
        %v878 = vand.u32 %v877, 4294901760
        %879 = vmatpush1.msra.mxu0 %v878
        %880 = vmatprep.subr.mxu0 0.0
        %v881 = vand.u32 %v202, 4294901760
        %v882 = vsub.f32 %v202, %v881
        %v883 = vand.u32 %v882, 4294901760
        %884 = vmatpush2.msra.mxu0 %v883
        %885 = vmatprep.subr.mxu0 0.0
        %v886 = vand.u32 %v201, 4294901760
        %v887 = vsub.f32 %v201, %v886
        %v888 = vand.u32 %v887, 4294901760
        %889 = vmatpush2.msra.mxu0 %v888
        %890 = vmatprep.subr.mxu0 0.0
        %v891 = vand.u32 %v200, 4294901760
        %v892 = vsub.f32 %v200, %v891
        %v893 = vand.u32 %v892, 4294901760
        %894 = vmatpush2.msra.mxu0 %v893
        %895 = vmatprep.subr.mxu0 0.0
        %v896 = vand.u32 %v199, 4294901760
        %v897 = vsub.f32 %v199, %v896
        %v898 = vand.u32 %v897, 4294901760
        %899 = vmatpush2.msra.mxu0 %v898
        %900 = vmatprep.subr.mxu0 0.0
        %v901 = vand.u32 %v198, 4294901760
        %v902 = vsub.f32 %v198, %v901
        %v903 = vand.u32 %v902, 4294901760
        %904 = vmatpush2.msra.mxu0 %v903
        %905 = vmatprep.subr.mxu0 0.0
        %v906 = vand.u32 %v197, 4294901760
        %v907 = vsub.f32 %v197, %v906
        %v908 = vand.u32 %v907, 4294901760
        %909 = vmatpush2.msra.mxu0 %v908
        %910 = vmatprep.subr.mxu0 0.0
        %v911 = vand.u32 %v196, 4294901760
        %v912 = vsub.f32 %v196, %v911
        %v913 = vand.u32 %v912, 4294901760
        %914 = vmatpush2.msra.mxu0 %v913
        %915 = vmatprep.subr.mxu0 0.0
        %v916 = vand.u32 %v195, 4294901760
        %v917 = vsub.f32 %v195, %v916
        %v918 = vand.u32 %v917, 4294901760
        %919 = vmatpush2.msra.mxu0 %v918
        %920 = vmatprep.subr.mxu0 0.0
        %v921 = vand.u32 %v194, 4294901760
        %v922 = vsub.f32 %v194, %v921
        %v923 = vand.u32 %v922, 4294901760
        %924 = vmatpush2.msra.mxu0 %v923
        %925 = vmatprep.subr.mxu0 0.0
        %v926 = vand.u32 %v193, 4294901760
        %v927 = vsub.f32 %v193, %v926
        %v928 = vand.u32 %v927, 4294901760
        %929 = vmatpush2.msra.mxu0 %v928
        %930 = vmatprep.subr.mxu0 0.0
        %v931 = vand.u32 %v192, 4294901760
        %v932 = vsub.f32 %v192, %v931
        %v933 = vand.u32 %v932, 4294901760
        %934 = vmatpush2.msra.mxu0 %v933
        %935 = vmatprep.subr.mxu0 0.0
        %v936 = vand.u32 %v191, 4294901760
        %v937 = vsub.f32 %v191, %v936
        %v938 = vand.u32 %v937, 4294901760
        %939 = vmatpush2.msra.mxu0 %v938
        %940 = vmatprep.subr.mxu0 0.0
        %v941 = vand.u32 %v190, 4294901760
        %v942 = vsub.f32 %v190, %v941
        %v943 = vand.u32 %v942, 4294901760
        %944 = vmatpush2.msra.mxu0 %v943
        %945 = vmatprep.subr.mxu0 0.0
        %v946 = vand.u32 %v189, 4294901760
        %v947 = vsub.f32 %v189, %v946
        %v948 = vand.u32 %v947, 4294901760
        %949 = vmatpush2.msra.mxu0 %v948
        %950 = vmatprep.subr.mxu0 0.0
        %v951 = vand.u32 %v188, 4294901760
        %v952 = vsub.f32 %v188, %v951
        %v953 = vand.u32 %v952, 4294901760
        %954 = vmatpush2.msra.mxu0 %v953
        %955 = vmatprep.subr.mxu0 0.0
        %v956 = vand.u32 %v187, 4294901760
        %v957 = vsub.f32 %v187, %v956
        %v958 = vand.u32 %v957, 4294901760
        %959 = vmatpush2.msra.mxu0 %v958
        %v960 = vand.u32 %v170, 4294901760
        %961 = vmatprep.mubr.f32.mxu0 %v960
        %v962 = vand.u32 %v169, 4294901760
        %963 = vmatmul.mubr.f32.gmra.mxu0 %v962
        %v964 = vpop.f32.mrf.mxu0
        %v965 = vadd.f32 %v797, %v964
        %v966 = vpop.f32.mrf.mxu0
        %967 = vdwg.mxu0
        %968 = vmatprep.subr.mxu0 0.0
        %v969 = vand.u32 %v186, 4294901760
        %970 = vmatpush1.msra.mxu0 %v969
        %971 = vmatprep.subr.mxu0 0.0
        %v972 = vand.u32 %v185, 4294901760
        %973 = vmatpush1.msra.mxu0 %v972
        %974 = vmatprep.subr.mxu0 0.0
        %v975 = vand.u32 %v184, 4294901760
        %976 = vmatpush1.msra.mxu0 %v975
        %977 = vmatprep.subr.mxu0 0.0
        %v978 = vand.u32 %v183, 4294901760
        %979 = vmatpush1.msra.mxu0 %v978
        %980 = vmatprep.subr.mxu0 0.0
        %v981 = vand.u32 %v182, 4294901760
        %982 = vmatpush1.msra.mxu0 %v981
        %983 = vmatprep.subr.mxu0 0.0
        %v984 = vand.u32 %v181, 4294901760
        %985 = vmatpush1.msra.mxu0 %v984
        %986 = vmatprep.subr.mxu0 0.0
        %v987 = vand.u32 %v180, 4294901760
        %988 = vmatpush1.msra.mxu0 %v987
        %989 = vmatprep.subr.mxu0 0.0
        %v990 = vand.u32 %v179, 4294901760
        %991 = vmatpush1.msra.mxu0 %v990
        %992 = vmatprep.subr.mxu0 0.0
        %v993 = vand.u32 %v178, 4294901760
        %994 = vmatpush1.msra.mxu0 %v993
        %995 = vmatprep.subr.mxu0 0.0
        %v996 = vand.u32 %v177, 4294901760
        %997 = vmatpush1.msra.mxu0 %v996
        %998 = vmatprep.subr.mxu0 0.0
        %v999 = vand.u32 %v176, 4294901760
        %1000 = vmatpush1.msra.mxu0 %v999
        %1001 = vmatprep.subr.mxu0 0.0
        %v1002 = vand.u32 %v175, 4294901760
        %1003 = vmatpush1.msra.mxu0 %v1002
        %1004 = vmatprep.subr.mxu0 0.0
        %v1005 = vand.u32 %v174, 4294901760
        %1006 = vmatpush1.msra.mxu0 %v1005
        %1007 = vmatprep.subr.mxu0 0.0
        %v1008 = vand.u32 %v173, 4294901760
        %1009 = vmatpush1.msra.mxu0 %v1008
        %1010 = vmatprep.subr.mxu0 0.0
        %v1011 = vand.u32 %v172, 4294901760
        %1012 = vmatpush1.msra.mxu0 %v1011
        %1013 = vmatprep.subr.mxu0 0.0
        %v1014 = vand.u32 %v171, 4294901760
        %1015 = vmatpush1.msra.mxu0 %v1014
        %1016 = vmatprep.subr.mxu0 0.0
        %v1017 = vand.u32 %v202, 4294901760
        %1018 = vmatpush2.msra.mxu0 %v1017
        %1019 = vmatprep.subr.mxu0 0.0
        %v1020 = vand.u32 %v201, 4294901760
        %1021 = vmatpush2.msra.mxu0 %v1020
        %1022 = vmatprep.subr.mxu0 0.0
        %v1023 = vand.u32 %v200, 4294901760
        %1024 = vmatpush2.msra.mxu0 %v1023
        %1025 = vmatprep.subr.mxu0 0.0
        %v1026 = vand.u32 %v199, 4294901760
        %1027 = vmatpush2.msra.mxu0 %v1026
        %1028 = vmatprep.subr.mxu0 0.0
        %v1029 = vand.u32 %v198, 4294901760
        %1030 = vmatpush2.msra.mxu0 %v1029
        %1031 = vmatprep.subr.mxu0 0.0
        %v1032 = vand.u32 %v197, 4294901760
        %1033 = vmatpush2.msra.mxu0 %v1032
        %1034 = vmatprep.subr.mxu0 0.0
        %v1035 = vand.u32 %v196, 4294901760
        %1036 = vmatpush2.msra.mxu0 %v1035
        %1037 = vmatprep.subr.mxu0 0.0
        %v1038 = vand.u32 %v195, 4294901760
        %1039 = vmatpush2.msra.mxu0 %v1038
        %1040 = vmatprep.subr.mxu0 0.0
        %v1041 = vand.u32 %v194, 4294901760
        %1042 = vmatpush2.msra.mxu0 %v1041
        %1043 = vmatprep.subr.mxu0 0.0
        %v1044 = vand.u32 %v193, 4294901760
        %1045 = vmatpush2.msra.mxu0 %v1044
        %1046 = vmatprep.subr.mxu0 0.0
        %v1047 = vand.u32 %v192, 4294901760
        %1048 = vmatpush2.msra.mxu0 %v1047
        %1049 = vmatprep.subr.mxu0 0.0
        %v1050 = vand.u32 %v191, 4294901760
        %1051 = vmatpush2.msra.mxu0 %v1050
        %1052 = vmatprep.subr.mxu0 0.0
        %v1053 = vand.u32 %v190, 4294901760
        %1054 = vmatpush2.msra.mxu0 %v1053
        %1055 = vmatprep.subr.mxu0 0.0
        %v1056 = vand.u32 %v189, 4294901760
        %1057 = vmatpush2.msra.mxu0 %v1056
        %1058 = vmatprep.subr.mxu0 0.0
        %v1059 = vand.u32 %v188, 4294901760
        %1060 = vmatpush2.msra.mxu0 %v1059
        %1061 = vmatprep.subr.mxu0 0.0
        %v1062 = vand.u32 %v187, 4294901760
        %1063 = vmatpush2.msra.mxu0 %v1062
        %v1064 = vand.u32 %v170, 4294901760
        %1065 = vmatprep.mubr.f32.mxu0 %v1064
        %v1066 = vand.u32 %v169, 4294901760
        %1067 = vmatmul.mubr.f32.gmra.mxu0 %v1066
        %v1068 = vpop.f32.mrf.mxu0
        %v1069 = vadd.f32 %v965, %v1068
        %v1070 = vpop.f32.mrf.mxu0
        %1071 = vdwg.mxu0
        %vm1072 = vcmask 130048
        %1073 = vst.msk [vmem:[%s163] sm:$0xff] %vm1072, %v1069
        %s1074 = sand.u32 %s93, 1
        %s1075 = scalar_lea.sflag [#allocation3], %s1074
        %s1076 = sand.u32 %s93, 1
        %s1077 = smul.addr %s1076, 8
        %s1078 = scalar_lea.vmem [#allocation2], %s1077
        // Predicated region
        $region33: #{tpu_custom_call.1} parent=31 // pred_check
          %p1079 = pneg %p103
        $region34: #{tpu_custom_call.1} parent=31 // pred_check_branch
          %1081 = sbr.rel (%p1079) target = $region36
        $region35: #{tpu_custom_call.1} parent=31 // pred_region
          %s1083 = ssub.s32 128, 128
          %1084 = vsyncadd %s1075, %s1083
          %s1085 = smul.addr %s17, 128
          %s1086 = scalar_lea.hbm %s3, %s1085
          %s1088 = sshll.u32 %s1078, 4
          %s1089 = int_to_ptr.vmem [resolvable:$true] %s1088
          %1091 = dma.vmem_to_hbm [thread:$0]  %s1089, 128, %s1086, %s1075
        $region36: #{tpu_custom_call.1} parent=31 // pred_fallthru
          _
      $region32: #{tpu_custom_call.1} parent=5 // pred_fallthru
        _
      %p1092 = scmp.le.s32.totalorder 2, %s12
      // Predicated region
      $region37: #{tpu_custom_call.1} parent=5 // pred_check
        %p1093 = pneg %p1092
      $region38: #{tpu_custom_call.1} parent=5 // pred_check_branch
        %1095 = sbr.rel (%p1093) target = $region40
      $region39: #{tpu_custom_call.1} parent=5 // pred_region
        %s1096 = ssub.s32 %s12, 2
        // Predicated region
        $region41: #{tpu_custom_call.1} parent=39 // pred_check
          %p1097 = pneg %p109
        $region42: #{tpu_custom_call.1} parent=39 // pred_check_branch
          %1099 = sbr.rel (%p1097) target = $region44
        $region43: #{tpu_custom_call.1} parent=39 // pred_region
          %s1100 = sand.u32 %s94, 1
          %s1101 = scalar_lea.sflag [#allocation3], %s1100
          %s1102 = sand.u32 %s94, 1
          %s1103 = smul.addr %s1102, 8
          %s1104 = scalar_lea.vmem [#allocation2], %s1103
          %1105 = dma.done %s1101, 128
        $region44: #{tpu_custom_call.1} parent=39 // pred_fallthru
          _
      $region40: #{tpu_custom_call.1} parent=5 // pred_fallthru
        _
    $region6: #{tpu_custom_call.1} parent=1 // loop_footer
      %s16 = sadd.s32 1, %s12
    $region7: #{tpu_custom_call.1} parent=1 // loop_footer_branch
      %11 = sbr.rel target = $region3
    $region8: #{tpu_custom_call.1} parent=1 // loop_exit
      _
    %1106 = vsyncpa [#allocation3], 1
    %s1107 = scalar_lea.sflag [#allocation3], 1
    %1108 = vsyncpa %s1107, 1

</llo_original>
